<compile_context>
chip_gen: v7x
topology: tpu7x:2x2x1
jax: 0.10.0
libtpu: 0.0.40
codegen_flags: <defaults>
</compile_context>

<pallas_src>
import math

import jax
import jax.numpy as jnp
from jax.experimental import pallas as pl
from jax.experimental.pallas import tpu as pltpu


# ---------------------------------------------------------------------------
# kernel
# ---------------------------------------------------------------------------
def _make_pixelate_kernel(inv_scale: float):
    """Returns a kernel processing a (B, H, L) block of folded plane groups.

    For each group (an (H, L) slab, L = G*W planes folded into lanes):
      Y = (M_h @ X @ M_w) * inv_scale
    where M_h (H,H) and M_w (L,L) are 0/1 same-block indicators, so the two
    contractions are plain bf16 MXU matmuls with f32 accumulation and the
    averaging scale is a single VPU multiply on the f32 accumulator.
    """
    def kernel(x_ref, mh_ref, mw_ref, o_ref):
        mh = mh_ref[...]                       # (H, L) block row-operator, bf16 0/1
        mw = mw_ref[...]                       # (L, L) block col-operator, bf16 0/1
        for b in range(x_ref.shape[0]):        # static unroll, B is small (<=32)
            xg = x_ref[b].astype(jnp.bfloat16)                          # (H, L)
            t = jnp.dot(mh, xg, preferred_element_type=jnp.float32)     # (H, L)
            y = jnp.dot(t.astype(jnp.bfloat16), mw,
                        preferred_element_type=jnp.float32)             # (H, L)
            # TODO(synk): integer image dtypes (e.g. uint8) would need explicit
            # rounding here to match PIL BOX rounding; float dtypes are fine.
            o_ref[b] = (y * inv_scale).astype(o_ref.dtype)
    return kernel


# ---------------------------------------------------------------------------
# host-side helpers
# ---------------------------------------------------------------------------
def _block_mat(n: int, k: int) -> jax.Array:
    """(n, n) 0/1 matrix: 1 iff row and column fall in the same k-block."""
    idx = jnp.arange(n) // k
    return (idx[:, None] == idx[None, :]).astype(jnp.bfloat16)


def _largest_divisor_at_most(n: int, limit: int) -> int:
    limit = max(1, min(n, limit))
    for d in range(limit, 0, -1):
        if n % d == 0:
            return d
    return 1


# ---------------------------------------------------------------------------
# wrapper
# ---------------------------------------------------------------------------
def pixelate(x: jax.Array, shrink_to: float = 0.5) -> jax.Array:
    """Block-average + nearest-upsample of an NCHW batch via Pallas."""
    n, c, h, w = x.shape
    k = int(round(1.0 / shrink_to))
    # TODO(synk): PIL semantics for shrink factors that are not 1/integer, or
    # H/W not divisible by k (ragged last block), are not reproduced.
    assert abs(1.0 / k - shrink_to) < 1e-6, "shrink_to must be 1/integer"
    assert h % k == 0 and w % k == 0, "H and W must be divisible by 1/shrink_to"

    p_planes = n * c
    itemsize = jnp.dtype(x.dtype).itemsize

    # --- fold G planes into the lane axis so stores are lane-dense ----------
    g = 128 // math.gcd(w, 128)
    if p_planes % g != 0 or g * w > 2048:
        g = 1                                   # fallback: lane-masked stores
    xr = x.reshape(p_planes, h, w)
    if g > 1:
        xg = (xr.reshape(p_planes // g, g, h, w)
                .transpose(0, 2, 1, 3)
                .reshape(p_planes // g, h, g * w))
    else:
        xg = xr
    m, _, l = xg.shape                          # m groups, lane length L = G*W

    # --- combined pool+upsample 0/1 operators (W-pooling never crosses a
    #     plane boundary since W % k == 0, so the flat-L operator is exactly
    #     block-diagonal with identical per-plane blocks) ---------------------
    mh = _block_mat(h, k)                       # (H, H) bf16 0/1
    mw = _block_mat(l, k)                       # (L, L) bf16 0/1
    inv_scale = 1.0 / float(k * k)

    # --- choose groups-per-step: big enough to amortize per-step overhead,
    #     small enough for VMEM on v7x, and keep >=2 steps for 2-TC sharding --
    target_bytes = 2 << 20
    group_bytes = h * l * itemsize
    bgrp = _largest_divisor_at_most(m, min(32, max(1, target_bytes // group_bytes)))
    if m >= 2 and m // bgrp < 2:
        bgrp = _largest_divisor_at_most(m, max(1, m // 2))
    grid = (m // bgrp,)

    block_bytes = bgrp * h * l * itemsize
    weight_bytes = (h * h + l * l) * 2          # bf16 operators
    vmem_est = 8 * block_bytes + 2 * weight_bytes + (2 << 20)
    vmem_limit = int(min(48 << 20, max(16 << 20, vmem_est)))

    flops_per_group = 2 * (h * h * l + h * l * l)
    cost = pl.CostEstimate(
        flops=flops_per_group * m,
        transcendentals=0,
        bytes_accessed=2 * x.size * itemsize + weight_bytes,
    )

    yg = pl.pallas_call(
        _make_pixelate_kernel(inv_scale),
        out_shape=jax.ShapeDtypeStruct(xg.shape, x.dtype),
        grid=grid,
        in_specs=[
            pl.BlockSpec((bgrp, h, l), lambda i: (i, 0, 0)),
            pl.BlockSpec((h, h), lambda i: (0, 0)),
            pl.BlockSpec((l, l), lambda i: (0, 0)),
        ],
        out_specs=pl.BlockSpec((bgrp, h, l), lambda i: (i, 0, 0)),
        compiler_params=pltpu.CompilerParams(
            dimension_semantics=("parallel",),
            vmem_limit_bytes=vmem_limit,
        ),
        cost_estimate=cost,
    )(xg, mh, mw)

    if g > 1:
        y = (yg.reshape(m, h, g, w)
               .transpose(0, 2, 1, 3)
               .reshape(n, c, h, w))
    else:
        y = yg.reshape(n, c, h, w)
    return y


def random_pixelate(x: jax.Array, key: jax.Array,
                    shrink_to: float = 0.5, p: float = 0.5) -> jax.Array:
    """Deterministic JAX analogue of RandomPixelate.forward.

    The random gate (torch.rand(1).item() < p) becomes jax.random + lax.cond,
    so the kernel (and its HBM traffic) is skipped when the transform is not
    applied.
    """
    u = jax.random.uniform(key)
    return jax.lax.cond(u < p,
                        lambda a: pixelate(a, shrink_to),
                        lambda a: a,
                        x)


# ---------------------------------------------------------------------------
# pure-JAX reference + test
# ---------------------------------------------------------------------------
def _reference_pixelate(x: jax.Array, k: int) -> jax.Array:
    n, c, h, w = x.shape
    pooled = x.reshape(n, c, h // k, k, w // k, k).mean(axis=(3, 5))
    return jnp.repeat(jnp.repeat(pooled, k, axis=2), k, axis=3)


if __name__ == "__main__":
    key = jax.random.PRNGKey(0)
    k_img, k_img2, k_gate = jax.random.split(key, 3)

    # Primary case: small planes, lane-folding path (G = 8 -> lane width 128).
    x = jax.random.uniform(k_img, (2, 4, 16, 16), dtype=jnp.float32)
    y_kernel = jax.block_until_ready(pixelate(x, shrink_to=0.5))
    y_ref = _reference_pixelate(x, 2)
    # bf16 matmul inputs with f32 accumulation -> ~1e-3 relative error budget.
    assert jnp.allclose(y_kernel, y_ref, atol=2e-2, rtol=2e-2)

    # Secondary case exercising the non-folded fallback path (P % G != 0).
    x2 = jax.random.uniform(k_img2, (1, 3, 32, 32), dtype=jnp.float32)
    y2_kernel = jax.block_until_ready(pixelate(x2, shrink_to=0.5))
    y2_ref = _reference_pixelate(x2, 2)
    assert jnp.allclose(y2_kernel, y2_ref, atol=2e-2, rtol=2e-2)

    # Full module semantics (random gate with p=0.5).
    out = jax.block_until_ready(random_pixelate(x, k_gate, shrink_to=0.5, p=0.5))
    assert out.shape == x.shape and out.dtype == x.dtype

    print("KERNEL_OK")
</pallas_src>

<mosaic_0001>
module attributes {stable_mosaic.version = 11 : i64} {
  func.func @kernel(%arg0: i32, %arg1: memref<1x16x128xf32, #tpu.memory_space<vmem>>, %arg2: memref<16x16xbf16, #tpu.memory_space<vmem>>, %arg3: memref<128x128xbf16, #tpu.memory_space<vmem>>, %arg4: memref<1x16x128xf32, #tpu.memory_space<vmem>>) attributes {dimension_semantics = [#tpu.dimension_semantics<parallel>], iteration_bounds = array<i64: 1>, scalar_prefetch = 0 : i64, scratch_operands = 0 : i64, tpu.core_type = #tpu.core_type<tc>, window_params = [{transform_indices = @transform_0, window_bounds = array<i64: 1, 16, 128>}, {pipeline_mode = #tpu.pipeline_mode<synchronous>, transform_indices = @transform_1, window_bounds = array<i64: 16, 16>}, {pipeline_mode = #tpu.pipeline_mode<synchronous>, transform_indices = @transform_2, window_bounds = array<i64: 128, 128>}, {transform_indices = @transform_3, window_bounds = array<i64: 1, 16, 128>}]} {
    %c0 = arith.constant 0 : index
    %c0_0 = arith.constant 0 : index
    %0 = vector.load %arg2[%c0, %c0_0] : memref<16x16xbf16, #tpu.memory_space<vmem>>, vector<16x16xbf16>
    %c0_1 = arith.constant 0 : index
    %c0_2 = arith.constant 0 : index
    %1 = vector.load %arg3[%c0_1, %c0_2] : memref<128x128xbf16, #tpu.memory_space<vmem>>, vector<128x128xbf16>
    %c0_3 = arith.constant 0 : index
    %c0_4 = arith.constant 0 : index
    %c0_5 = arith.constant 0 : index
    %2 = vector.load %arg1[%c0_3, %c0_4, %c0_5] : memref<1x16x128xf32, #tpu.memory_space<vmem>>, vector<1x16x128xf32>
    %3 = vector.shape_cast %2 : vector<1x16x128xf32> to vector<16x128xf32>
    %4 = arith.truncf %3 : vector<16x128xf32> to vector<16x128xbf16>
    %cst = arith.constant dense<0.000000e+00> : vector<16x128xf32>
    %5 = tpu.matmul %0, %4, %cst {dimension_numbers = #tpu.dot_dimension_numbers<[1], [0], [0], [1], [0, 0, 1, 1], [], []>} : vector<16x16xbf16>, vector<16x128xbf16>, vector<16x128xf32> -> vector<16x128xf32>
    %6 = arith.truncf %5 : vector<16x128xf32> to vector<16x128xbf16>
    %cst_6 = arith.constant dense<0.000000e+00> : vector<16x128xf32>
    %7 = tpu.matmul %6, %1, %cst_6 {dimension_numbers = #tpu.dot_dimension_numbers<[1], [0], [0], [1], [0, 0, 1, 1], [], []>} : vector<16x128xbf16>, vector<128x128xbf16>, vector<16x128xf32> -> vector<16x128xf32>
    %cst_7 = arith.constant 2.500000e-01 : f32
    %8 = vector.broadcast %cst_7 : f32 to vector<16x128xf32>
    %9 = arith.mulf %7, %8 : vector<16x128xf32>
    %c0_8 = arith.constant 0 : index
    %c0_9 = arith.constant 0 : index
    %c0_10 = arith.constant 0 : index
    %10 = vector.load %arg4[%c0_8, %c0_9, %c0_10] : memref<1x16x128xf32, #tpu.memory_space<vmem>>, vector<1x16x128xf32>
    %11 = vector.shape_cast %10 : vector<1x16x128xf32> to vector<16x128xf32>
    %12 = vector.shape_cast %9 : vector<16x128xf32> to vector<1x16x128xf32>
    tpu.vector_store %arg4[%c0_8, %c0_9, %c0_10], %12 {strides = array<i32>} : memref<1x16x128xf32, #tpu.memory_space<vmem>>, vector<1x16x128xf32>,
    return
  }
  func.func @transform_0(%arg0: i32) -> (i32, i32, i32) {
    %c0_i32 = arith.constant 0 : i32
    %c0_i32_0 = arith.constant 0 : i32
    %c0_i32_1 = arith.constant 0 : i32
    return %arg0, %c0_i32, %c0_i32_0 : i32, i32, i32
  }
  func.func @transform_1(%arg0: i32) -> (i32, i32) {
    %c0_i32 = arith.constant 0 : i32
    %c0_i32_0 = arith.constant 0 : i32
    %c0_i32_1 = arith.constant 0 : i32
    return %c0_i32, %c0_i32_0 : i32, i32
  }
  func.func @transform_2(%arg0: i32) -> (i32, i32) {
    %c0_i32 = arith.constant 0 : i32
    %c0_i32_0 = arith.constant 0 : i32
    %c0_i32_1 = arith.constant 0 : i32
    return %c0_i32, %c0_i32_0 : i32, i32
  }
  func.func @transform_3(%arg0: i32) -> (i32, i32, i32) {
    %c0_i32 = arith.constant 0 : i32
    %c0_i32_0 = arith.constant 0 : i32
    %c0_i32_1 = arith.constant 0 : i32
    return %arg0, %c0_i32, %c0_i32_0 : i32, i32, i32
  }
}

</mosaic_0001>

<llo_original>
// kernel: tpu_custom_call.1
$region0: #{tpu_custom_call.1}
  #allocation0 [shape = 'u32[]', space=smem, size = 0x4, offset = 0x4, fixed_abs, tag = 'smem constant byte address 0x4 - core index']
  #allocation1 [shape = 'u32[144,128]{1,0:T(1,128)}', space=vmem, size = 0x12000, scoped, tag = 'internal scratch']
  %s0 = inlined_call_operand.hbm [shape: f32[1,16,128], index: 0, kind: input, shape index: {}]
  %s1 = inlined_call_operand.hbm [shape: bf16[16,16], index: 1, kind: input, shape index: {}]
  %s2 = inlined_call_operand.hbm [shape: bf16[128,128], index: 2, kind: input, shape index: {}]
  %s3 = inlined_call_operand.hbm [shape: f32[1,16,128], index: 3, kind: output, shape index: {}]
  %s4 = sld [smem:[#allocation0]]
  $region34: #{tpu_custom_call.1} parent=0
    _
  %s6 = ssub.s32 1, %s4
  %s7 = scalar_select 0, %s6, %s4
  $region1: #{tpu_custom_call.1} parent=0
    #allocation2 [shape = 'u8[8192]{0}', space=vmem, size = 0x2000, scoped, tag = 'input window, operand 0, single buffered']
    #allocation3 [shape = 's32[1]{0}', space=sflag, size = 0x4, scoped, tag = 'scoped memory for tpu_custom_call.1']
    #allocation4 [shape = 's32[1]{0}', space=sflag, size = 0x4, scoped, tag = 'scoped memory for tpu_custom_call.1']
    #allocation5 [shape = 'u8[4096]{0}', space=vmem, size = 0x1000, scoped, tag = 'input window, operand 1, single buffered']
    #allocation6 [shape = 's32[1]{0}', space=sflag, size = 0x4, scoped, tag = 'scoped memory for tpu_custom_call.1']
    #allocation7 [shape = 'u8[32768]{0}', space=vmem, size = 0x8000, scoped, tag = 'input window, operand 2, single buffered']
    #allocation8 [shape = 'u8[8192]{0}', space=vmem, size = 0x2000, scoped, tag = 'output window, operand 0, single buffered']
    %8 = vsyncpa [#allocation3], 0
    %9 = vsyncpa [#allocation6], 0
    %10 = vsyncpa [#allocation4], 0
    // Predicated region
    $region2: #{tpu_custom_call.1} parent=1 // pred_check
      _
    $region3: #{tpu_custom_call.1} parent=1 // pred_check_branch
      %12 = sbr.rel (0) target = $region5
    $region4: #{tpu_custom_call.1} parent=1 // pred_region
      %s14 = ssub.s32 256, 256
      %15 = vsyncadd [#allocation3], %s14
      %s16 = sshll.u32 [#allocation2], 4
      %s17 = int_to_ptr.vmem [resolvable:$true] %s16
      %22 = dma.hbm_to_vmem [thread:$0]  %s0, 256, %s17, [#allocation3], 128, 128, 8
    $region5: #{tpu_custom_call.1} parent=1 // pred_fallthru
      _
    // Predicated region
    $region6: #{tpu_custom_call.1} parent=1 // pred_check
      _
    $region7: #{tpu_custom_call.1} parent=1 // pred_check_branch
      %24 = sbr.rel (0) target = $region9
    $region8: #{tpu_custom_call.1} parent=1 // pred_region
      %s26 = ssub.s32 128, 128
      %27 = vsyncadd [#allocation6], %s26
      %s28 = sshll.u32 [#allocation5], 4
      %s29 = int_to_ptr.vmem [resolvable:$true] %s28
      %34 = dma.hbm_to_vmem [thread:$0]  %s1, 128, %s29, [#allocation6], 64, 64, 4
    $region9: #{tpu_custom_call.1} parent=1 // pred_fallthru
      _
    // Predicated region
    $region10: #{tpu_custom_call.1} parent=1 // pred_check
      _
    $region11: #{tpu_custom_call.1} parent=1 // pred_check_branch
      %36 = sbr.rel (0) target = $region13
    $region12: #{tpu_custom_call.1} parent=1 // pred_region
      %s38 = ssub.s32 1024, 1024
      %39 = vsyncadd [#allocation6], %s38
      %s40 = sshll.u32 [#allocation7], 4
      %s41 = int_to_ptr.vmem [resolvable:$true] %s40
      %46 = dma.hbm_to_vmem [thread:$0]  %s2, 1024, %s41, [#allocation6], 64, 64, 4
    $region13: #{tpu_custom_call.1} parent=1 // pred_fallthru
      _
    // Predicated region
    $region14: #{tpu_custom_call.1} parent=1 // pred_check
      _
    $region15: #{tpu_custom_call.1} parent=1 // pred_check_branch
      %48 = sbr.rel (0) target = $region17
    $region16: #{tpu_custom_call.1} parent=1 // pred_region
      %49 = dma.done [#allocation3], 256
    $region17: #{tpu_custom_call.1} parent=1 // pred_fallthru
      _
    // Predicated region
    $region18: #{tpu_custom_call.1} parent=1 // pred_check
      _
    $region19: #{tpu_custom_call.1} parent=1 // pred_check_branch
      %51 = sbr.rel (0) target = $region21
    $region20: #{tpu_custom_call.1} parent=1 // pred_region
      %52 = dma.done [#allocation6], 128
    $region21: #{tpu_custom_call.1} parent=1 // pred_fallthru
      _
    // Predicated region
    $region22: #{tpu_custom_call.1} parent=1 // pred_check
      _
    $region23: #{tpu_custom_call.1} parent=1 // pred_check_branch
      %54 = sbr.rel (0) target = $region25
    $region24: #{tpu_custom_call.1} parent=1 // pred_region
      %55 = dma.done [#allocation6], 1024
    $region25: #{tpu_custom_call.1} parent=1 // pred_fallthru
      _
    %v57 = vld [vmem:[#allocation5] sm:$0xf]
    %v58 = vld [vmem:[#allocation5 + $0x4] sm:$0xf]
    %v59 = vld [vmem:[#allocation7] sm:$0xf]
    %v60 = vld [vmem:[#allocation7 + $0x4] sm:$0xf]
    %v61 = vld [vmem:[#allocation7 + $0x8] sm:$0xf]
    %v62 = vld [vmem:[#allocation7 + $0xc] sm:$0xf]
    %v63 = vld [vmem:[#allocation7 + $0x10] sm:$0xf]
    %v64 = vld [vmem:[#allocation7 + $0x14] sm:$0xf]
    %v65 = vld [vmem:[#allocation7 + $0x18] sm:$0xf]
    %v66 = vld [vmem:[#allocation7 + $0x1c] sm:$0xf]
    %v67 = vld [vmem:[#allocation7 + $0x20] sm:$0xf]
    %v68 = vld [vmem:[#allocation7 + $0x24] sm:$0xf]
    %v69 = vld [vmem:[#allocation7 + $0x28] sm:$0xf]
    %v70 = vld [vmem:[#allocation7 + $0x2c] sm:$0xf]
    %v71 = vld [vmem:[#allocation7 + $0x30] sm:$0xf]
    %v72 = vld [vmem:[#allocation7 + $0x34] sm:$0xf]
    %v73 = vld [vmem:[#allocation7 + $0x38] sm:$0xf]
    %v74 = vld [vmem:[#allocation7 + $0x3c] sm:$0xf]
    %v75 = vld [vmem:[#allocation2] sm:$0xff]
    %v76 = vld [vmem:[#allocation2 + $0x8] sm:$0xff]
    %v77 = vpack.c.bf16 %v76, %v75
    %v80 = vunpack.c.l.b16 %v57
    %v81 = vunpack.c.l.b16 %v58
    %v82 = vpack.c.b16 %v81, %v80
    %vm83 = vcmask 130048
    %v85 = vsel %vm83, %v82, 0
    %87 = vmatprep.subr.bf16.mxu0 0
    %88 = vmatpush1.bf16.msra.mxu0 %v77
    %89 = vmatprep.subr.bf16.mxu0 0
    %90 = vmatpush1.bf16.msra.mxu0 0
    %91 = vmatprep.subr.bf16.mxu0 0
    %92 = vmatpush1.bf16.msra.mxu0 0
    %93 = vmatprep.subr.bf16.mxu0 0
    %94 = vmatpush1.bf16.msra.mxu0 0
    %95 = vmatprep.subr.bf16.mxu0 0
    %96 = vmatpush1.bf16.msra.mxu0 0
    %97 = vmatprep.subr.bf16.mxu0 0
    %98 = vmatpush1.bf16.msra.mxu0 0
    %99 = vmatprep.subr.bf16.mxu0 0
    %100 = vmatpush1.bf16.msra.mxu0 0
    %101 = vmatprep.subr.bf16.mxu0 0
    %102 = vmatpush1.bf16.msra.mxu0 0
    %103 = vmatprep.subr.bf16.mxu0 0
    %104 = vmatpush1.bf16.msra.mxu0 0
    %105 = vmatprep.subr.bf16.mxu0 0
    %106 = vmatpush1.bf16.msra.mxu0 0
    %107 = vmatprep.subr.bf16.mxu0 0
    %108 = vmatpush1.bf16.msra.mxu0 0
    %109 = vmatprep.subr.bf16.mxu0 0
    %110 = vmatpush1.bf16.msra.mxu0 0
    %111 = vmatprep.subr.bf16.mxu0 0
    %112 = vmatpush1.bf16.msra.mxu0 0
    %113 = vmatprep.subr.bf16.mxu0 0
    %114 = vmatpush1.bf16.msra.mxu0 0
    %115 = vmatprep.subr.bf16.mxu0 0
    %116 = vmatpush1.bf16.msra.mxu0 0
    %117 = vmatprep.subr.bf16.mxu0 0
    %118 = vmatpush1.bf16.msra.mxu0 0
    %119 = vmatprep.mubr.bf16.mxu0 0
    %120 = vmatmul.mubr.bf16.gmra.mrb[0].mxu0 %v85
    %v121 = vpop.f32.mrb[0].mxu0
    %v122 = vadd.f32 0.0, %v121
    %v123 = vpop.f32.mrb[0].mxu0
    %v124 = vpop.f32.mrb[0].mxu0
    %v125 = vadd.f32 0.0, %v124
    %v126 = vpop.f32.mrb[0].mxu0
    %127 = vdwg.mxu0
    %v128 = vpack.c.bf16 %v125, %v122
    %v145 = vunpack.c.l.b16 %v59
    %v146 = vunpack.c.l.b16 %v60
    %v147 = vunpack.c.l.b16 %v61
    %v148 = vunpack.c.l.b16 %v62
    %v149 = vunpack.c.l.b16 %v63
    %v150 = vunpack.c.l.b16 %v64
    %v151 = vunpack.c.l.b16 %v65
    %v152 = vunpack.c.l.b16 %v66
    %v153 = vunpack.c.l.b16 %v67
    %v154 = vunpack.c.l.b16 %v68
    %v155 = vunpack.c.l.b16 %v69
    %v156 = vunpack.c.l.b16 %v70
    %v157 = vunpack.c.l.b16 %v71
    %v158 = vunpack.c.l.b16 %v72
    %v159 = vunpack.c.l.b16 %v73
    %v160 = vunpack.c.l.b16 %v74
    %v161 = vpack.c.b16 %v146, %v145
    %v162 = vpack.c.b16 %v148, %v147
    %v163 = vpack.c.b16 %v150, %v149
    %v164 = vpack.c.b16 %v152, %v151
    %v165 = vpack.c.b16 %v154, %v153
    %v166 = vpack.c.b16 %v156, %v155
    %v167 = vpack.c.b16 %v158, %v157
    %v168 = vpack.c.b16 %v160, %v159
    %177 = vmatprep.subr.bf16.mxu0 0
    %178 = vmatpush1.bf16.msra.mxu0 %v161
    %179 = vmatprep.subr.bf16.mxu0 0
    %180 = vmatpush1.bf16.msra.mxu0 %v162
    %181 = vmatprep.subr.bf16.mxu0 0
    %182 = vmatpush1.bf16.msra.mxu0 %v163
    %183 = vmatprep.subr.bf16.mxu0 0
    %184 = vmatpush1.bf16.msra.mxu0 %v164
    %185 = vmatprep.subr.bf16.mxu0 0
    %186 = vmatpush1.bf16.msra.mxu0 %v165
    %187 = vmatprep.subr.bf16.mxu0 0
    %188 = vmatpush1.bf16.msra.mxu0 %v166
    %189 = vmatprep.subr.bf16.mxu0 0
    %190 = vmatpush1.bf16.msra.mxu0 %v167
    %191 = vmatprep.subr.bf16.mxu0 0
    %192 = vmatpush1.bf16.msra.mxu0 %v168
    %193 = vmatprep.subr.bf16.mxu0 0
    %194 = vmatpush1.bf16.msra.mxu0 0
    %195 = vmatprep.subr.bf16.mxu0 0
    %196 = vmatpush1.bf16.msra.mxu0 0
    %197 = vmatprep.subr.bf16.mxu0 0
    %198 = vmatpush1.bf16.msra.mxu0 0
    %199 = vmatprep.subr.bf16.mxu0 0
    %200 = vmatpush1.bf16.msra.mxu0 0
    %201 = vmatprep.subr.bf16.mxu0 0
    %202 = vmatpush1.bf16.msra.mxu0 0
    %203 = vmatprep.subr.bf16.mxu0 0
    %204 = vmatpush1.bf16.msra.mxu0 0
    %205 = vmatprep.subr.bf16.mxu0 0
    %206 = vmatpush1.bf16.msra.mxu0 0
    %207 = vmatprep.subr.bf16.mxu0 0
    %208 = vmatpush1.bf16.msra.mxu0 0
    %209 = vmatprep.mubr.bf16.mxu0 0
    %210 = vmatmul.mubr.bf16.gmra.mrb[0].mxu0 %v128
    %v211 = vpop.f32.mrb[0].mxu0
    %v212 = vadd.f32 0.0, %v211
    %v213 = vpop.f32.mrb[0].mxu0
    %v214 = vpop.f32.mrb[0].mxu0
    %v215 = vadd.f32 0.0, %v214
    %v216 = vpop.f32.mrb[0].mxu0
    %217 = vdwg.mxu0
    %v218 = vmul.f32 %v212, 0.25
    %v219 = vmul.f32 %v215, 0.25
    %220 = vst [vmem:[#allocation8] sm:$0xff] %v218
    %221 = vst [vmem:[#allocation8 + $0x8] sm:$0xff] %v219
    // Predicated region
    $region26: #{tpu_custom_call.1} parent=1 // pred_check
      _
    $region27: #{tpu_custom_call.1} parent=1 // pred_check_branch
      %223 = sbr.rel (0) target = $region29
    $region28: #{tpu_custom_call.1} parent=1 // pred_region
      %s225 = ssub.s32 256, 256
      %226 = vsyncadd [#allocation4], %s225
      %s227 = sshll.u32 [#allocation8], 4
      %s228 = int_to_ptr.vmem [resolvable:$true] %s227
      %233 = dma.vmem_to_hbm [thread:$0]  %s228, 256, %s3, [#allocation4], 128, 128, 8
    $region29: #{tpu_custom_call.1} parent=1 // pred_fallthru
      _
    // Predicated region
    $region30: #{tpu_custom_call.1} parent=1 // pred_check
      _
    $region31: #{tpu_custom_call.1} parent=1 // pred_check_branch
      %235 = sbr.rel (0) target = $region33
    $region32: #{tpu_custom_call.1} parent=1 // pred_region
      %236 = dma.done [#allocation4], 256
    $region33: #{tpu_custom_call.1} parent=1 // pred_fallthru
      _
    %237 = vsyncpa [#allocation3], 1
    %238 = vsyncpa [#allocation6], 1
    %239 = vsyncpa [#allocation4], 1

</llo_original>
